<compile_context>
chip_gen: v5e
topology: v5e:2x2
jax: 0.10.0
libtpu: 0.0.40
codegen_flags: <defaults>
</compile_context>

<pallas_src>
import functools

import jax
import jax.numpy as jnp
from jax import lax
from jax.experimental import pallas as pl
from jax.experimental.pallas import tpu as pltpu


def _dense_layer_kernel(x_ref, w1_ref, w2_ref, s1_ref, b1_ref, b2_ref, out_ref,
                        *, bn, cout, compute_dtype):
    # x_ref:  (Bn, Cin, L)        Bn batch elements per grid step (NCL layout)
    # w1_ref: (Cmid, Cin)         conv1 (1x1) weight, BN2 scale folded into rows
    # w2_ref: (3*Coutp, Cmid)     conv2 taps stacked on rows; Coutp = ceil(Cout/8)*8,
    #                             rows[k*Coutp : k*Coutp+Cout] = W2[:, :, k], pad rows zero
    # s1_ref, b1_ref: (Cin, 1)    folded BN1 scale / shift (per sublane)
    # b2_ref: (Cmid, 1)           folded BN2 shift
    # out_ref:(Bn, Cout, L)
    w1 = w1_ref[...]                                             # (Cmid, Cin)   compute_dtype
    w2 = w2_ref[...]                                             # (3*Coutp, Cmid)
    s1 = s1_ref[...]                                             # (Cin, 1) f32
    b1 = b1_ref[...]
    b2 = b2_ref[...]

    coutp = w2.shape[0] // 3
    L = x_ref.shape[2]

    # Hoisted loop-invariant masks (JAX does not CSE broadcast/iota across iterations).
    lane = lax.broadcasted_iota(jnp.int32, (coutp, L), 1)
    mask_first = lane == 0
    mask_last = lane == L - 1

    # Small static unrolled loop over the Bn samples in this block (Bn is capped at 8).
    for b in range(bn):
        x = x_ref[b].astype(jnp.float32)                         # (Cin, L) f32

        # BN1 (eval) + ReLU : per-channel (sublane) affine on the VPU, f32.
        h = jnp.maximum(x * s1 + b1, 0.0)                        # (Cin, L)

        # conv1 (1x1) == matmul over channels; BN2 scale already folded into w1.
        h = jnp.dot(w1, h.astype(compute_dtype),
                    preferred_element_type=jnp.float32)          # (Cmid, L) f32
        # BN2 shift + ReLU.
        h = jnp.maximum(h + b2, 0.0)                             # (Cmid, L)

        # conv2 (k=3, pad=1) as a single matmul over all three taps.
        p = jnp.dot(w2, h.astype(compute_dtype),
                    preferred_element_type=jnp.float32)          # (3*Coutp, L) f32

        p0 = p[0 * coutp:1 * coutp]   # tap k=0 -> pairs with h[:, l-1]
        p1 = p[1 * coutp:2 * coutp]   # tap k=1 -> pairs with h[:, l]
        p2 = p[2 * coutp:3 * coutp]   # tap k=2 -> pairs with h[:, l+1]

        # out[:, l] = p0[:, l-1] + p1[:, l] + p2[:, l+1], zero-padded at the boundaries.
        left = jnp.where(mask_first, 0.0, pltpu.roll(p0, shift=1, axis=1))
        right = jnp.where(mask_last, 0.0, pltpu.roll(p2, shift=L - 1, axis=1))

        out_ref[b] = (left + p1 + right)[:cout].astype(out_ref.dtype)


def _largest_divisor_leq(n, cap):
    cap = max(1, min(n, cap))
    for d in range(cap, 0, -1):
        if n % d == 0:
            return d
    return 1


def dense_layer_forward(x_ncl, params, *, compute_dtype=jnp.bfloat16,
                        vmem_budget_bytes=40 << 20):
    """x_ncl: (N, Cin, L), any float dtype (f32 or bf16). Returns (N, Cout, L) float32."""
    w1 = params["w1"].astype(compute_dtype)      # (Cmid, Cin)       BN2 scale folded in
    w2 = params["w2"].astype(compute_dtype)      # (3*Coutp, Cmid)   taps stacked, 8-aligned
    s1 = params["s1"]                            # (Cin, 1)
    b1 = params["b1"]                            # (Cin, 1)
    b2 = params["b2"]                            # (Cmid, 1)
    Cout = int(params["cout"])

    N, Cin, L = x_ncl.shape
    Cmid = w1.shape[0]
    Coutp = w2.shape[0] // 3

    # ---- Choose Bn (samples per grid step) from a VMEM budget. ----
    x_itemsize = jnp.dtype(x_ncl.dtype).itemsize
    c_itemsize = jnp.dtype(compute_dtype).itemsize
    per_sample = 2 * (Cin * L * x_itemsize + Cout * L * 4)       # double-buffered x + out
    fixed = (2 * (Cmid * Cin + 3 * Coutp * Cmid) * c_itemsize    # double-buffered weights
             + 2 * (2 * Cin + Cmid) * 4                          # BN vectors
             + 2 * (Cin + Cmid + 4 * Coutp) * L * 4)             # f32 intermediates (generous)
    bn_cap = max(1, (vmem_budget_bytes - fixed) // per_sample)
    bn_cap = min(bn_cap, 8)                                      # bound unrolled body size
    if N >= 2:
        bn_cap = min(bn_cap, -(-N // 2))   # keep grid >= 2 so v7x's 2 TCs both get work
    Bn = _largest_divisor_leq(N, bn_cap)
    grid_n = N // Bn

    need = fixed + Bn * per_sample
    vmem_limit = int(min(max(int(need * 1.5) + (8 << 20), 32 << 20), 64 << 20))

    kernel = functools.partial(_dense_layer_kernel, bn=Bn, cout=Cout,
                               compute_dtype=compute_dtype)
    return pl.pallas_call(
        kernel,
        out_shape=jax.ShapeDtypeStruct((N, Cout, L), jnp.float32),
        grid_spec=pltpu.PrefetchScalarGridSpec(
            num_scalar_prefetch=0,
            grid=(grid_n,),
            in_specs=[
                pl.BlockSpec((Bn, Cin, L), lambda n: (n, 0, 0)),      # x (NCL)
                pl.BlockSpec((Cmid, Cin), lambda n: (0, 0)),          # w1 (folded)
                pl.BlockSpec((3 * Coutp, Cmid), lambda n: (0, 0)),    # w2 stacked taps
                pl.BlockSpec((Cin, 1), lambda n: (0, 0)),             # s1
                pl.BlockSpec((Cin, 1), lambda n: (0, 0)),             # b1
                pl.BlockSpec((Cmid, 1), lambda n: (0, 0)),            # b2
            ],
            out_specs=pl.BlockSpec((Bn, Cout, L), lambda n: (n, 0, 0)),
        ),
        compiler_params=pltpu.CompilerParams(
            dimension_semantics=("parallel",),
            vmem_limit_bytes=vmem_limit),
    )(x_ncl, w1, w2, s1, b1, b2)


def make_params(key, num_input_features, growth_rate, bn_size, eps=1e-5):
    """Deterministic synthetic params (torch shapes), plus kernel-folded versions."""
    Cin = num_input_features
    Cmid = bn_size * growth_rate
    Cout = growth_rate
    Coutp = -(-Cout // 8) * 8          # pad tap rows to 8-aligned sublane offsets
    ks = jax.random.split(key, 10)

    # torch weights: conv1 (Cmid, Cin, 1), conv2 (Cout, Cmid, 3)
    w1_t = jax.random.normal(ks[0], (Cmid, Cin, 1), jnp.float32) * 0.1
    w2_t = jax.random.normal(ks[1], (Cout, Cmid, 3), jnp.float32) * 0.1

    # BN1 / BN2 eval-mode parameters.
    g1 = 1.0 + 0.1 * jax.random.normal(ks[2], (Cin,), jnp.float32)
    be1 = 0.1 * jax.random.normal(ks[3], (Cin,), jnp.float32)
    rm1 = 0.1 * jax.random.normal(ks[4], (Cin,), jnp.float32)
    rv1 = jnp.abs(1.0 + 0.1 * jax.random.normal(ks[5], (Cin,), jnp.float32))

    g2 = 1.0 + 0.1 * jax.random.normal(ks[6], (Cmid,), jnp.float32)
    be2 = 0.1 * jax.random.normal(ks[7], (Cmid,), jnp.float32)
    rm2 = 0.1 * jax.random.normal(ks[8], (Cmid,), jnp.float32)
    rv2 = jnp.abs(1.0 + 0.1 * jax.random.normal(ks[9], (Cmid,), jnp.float32))

    raw = dict(w1=w1_t, w2=w2_t, g1=g1, be1=be1, rm1=rm1, rv1=rv1,
               g2=g2, be2=be2, rm2=rm2, rv2=rv2, eps=eps)

    s1 = g1 / jnp.sqrt(rv1 + eps)
    b1 = be1 - rm1 * s1
    s2 = g2 / jnp.sqrt(rv2 + eps)
    b2 = be2 - rm2 * s2

    # Fold BN2 scale into conv1 rows; stack conv2 taps along 8-aligned output rows.
    w1 = w1_t[:, :, 0] * s2[:, None]                                    # (Cmid, Cin)
    w2 = jnp.zeros((3 * Coutp, Cmid), jnp.float32)
    for k in range(3):
        w2 = w2.at[k * Coutp:k * Coutp + Cout].set(w2_t[:, :, k])       # (3*Coutp, Cmid)

    params = dict(w1=w1, w2=w2,
                  s1=s1.reshape(Cin, 1), b1=b1.reshape(Cin, 1),
                  b2=b2.reshape(Cmid, 1), cout=Cout)
    return params, raw


def _reference(x_ncl, raw):
    """Pure-JAX reference from the RAW (unfolded) params — also checks the folding."""
    eps = raw["eps"]
    s1 = raw["g1"] / jnp.sqrt(raw["rv1"] + eps)
    b1 = raw["be1"] - raw["rm1"] * s1
    s2 = raw["g2"] / jnp.sqrt(raw["rv2"] + eps)
    b2 = raw["be2"] - raw["rm2"] * s2

    h = jnp.maximum(x_ncl * s1[None, :, None] + b1[None, :, None], 0.0)
    h = jnp.einsum("mc,ncl->nml", raw["w1"][:, :, 0], h)
    h = jnp.maximum(h * s2[None, :, None] + b2[None, :, None], 0.0)
    hp = jnp.pad(h, ((0, 0), (0, 0), (1, 1)))
    out = (jnp.einsum("om,nml->nol", raw["w2"][:, :, 0], hp[:, :, :-2])
           + jnp.einsum("om,nml->nol", raw["w2"][:, :, 1], hp[:, :, 1:-1])
           + jnp.einsum("om,nml->nol", raw["w2"][:, :, 2], hp[:, :, 2:]))
    return out


if __name__ == "__main__":
    # Shapes consistent with the module: num_input_features=16, growth_rate=8, bn_size=4
    # (Cmid = 32, Cout = 8). L = 128 so the length axis is exactly lane-dense.
    # N = 8 so Bn=4 samples are batched per grid step and the grid keeps 2 steps.
    N, Cin, L = 8, 16, 128
    growth_rate, bn_size = 8, 4

    key = jax.random.PRNGKey(0)
    kx, kp = jax.random.split(key)
    x = jax.random.normal(kx, (N, Cin, L), jnp.float32)
    params, raw = make_params(kp, Cin, growth_rate, bn_size)

    ref = _reference(x, raw)

    # Default path: bf16 MXU compute (all TPU generations), f32 BN/ReLU + accumulation.
    out = jax.block_until_ready(dense_layer_forward(x, params))
    assert out.shape == (N, growth_rate, L)
    assert jnp.allclose(out, ref, atol=5e-2, rtol=5e-2), \
        float(jnp.max(jnp.abs(out - ref)))

    # f32 matmul path (exact) — structural correctness check.
    out_f32 = jax.block_until_ready(
        dense_layer_forward(x, params, compute_dtype=jnp.float32))
    assert jnp.allclose(out_f32, ref, atol=1e-4, rtol=1e-4), \
        float(jnp.max(jnp.abs(out_f32 - ref)))

    # bf16 input path: halves the dominant x HBM read; BN1 still computed in f32.
    out_bf16_x = jax.block_until_ready(
        dense_layer_forward(x.astype(jnp.bfloat16), params))
    assert jnp.allclose(out_bf16_x, ref, atol=5e-2, rtol=5e-2), \
        float(jnp.max(jnp.abs(out_bf16_x - ref)))

    print("KERNEL_OK")
</pallas_src>

<mosaic_0001>
module attributes {stable_mosaic.version = 11 : i64} {
  func.func @_dense_layer_kernel(%arg0: i32, %arg1: memref<4x16x128xf32, #tpu.memory_space<vmem>>, %arg2: memref<32x16xbf16, #tpu.memory_space<vmem>>, %arg3: memref<24x32xbf16, #tpu.memory_space<vmem>>, %arg4: memref<16x1xf32, #tpu.memory_space<vmem>>, %arg5: memref<16x1xf32, #tpu.memory_space<vmem>>, %arg6: memref<32x1xf32, #tpu.memory_space<vmem>>, %arg7: memref<4x8x128xf32, #tpu.memory_space<vmem>>) attributes {dimension_semantics = [#tpu.dimension_semantics<parallel>], iteration_bounds = array<i64: 2>, scalar_prefetch = 0 : i64, scratch_operands = 0 : i64, tpu.core_type = #tpu.core_type<tc>, window_params = [{transform_indices = @transform_0, window_bounds = array<i64: 4, 16, 128>}, {pipeline_mode = #tpu.pipeline_mode<synchronous>, transform_indices = @transform_1, window_bounds = array<i64: 32, 16>}, {pipeline_mode = #tpu.pipeline_mode<synchronous>, transform_indices = @transform_2, window_bounds = array<i64: 24, 32>}, {pipeline_mode = #tpu.pipeline_mode<synchronous>, transform_indices = @transform_3, window_bounds = array<i64: 16, 1>}, {pipeline_mode = #tpu.pipeline_mode<synchronous>, transform_indices = @transform_4, window_bounds = array<i64: 16, 1>}, {pipeline_mode = #tpu.pipeline_mode<synchronous>, transform_indices = @transform_5, window_bounds = array<i64: 32, 1>}, {transform_indices = @transform_6, window_bounds = array<i64: 4, 8, 128>}]} {
    %c0 = arith.constant 0 : index
    %c0_0 = arith.constant 0 : index
    %0 = vector.load %arg2[%c0, %c0_0] : memref<32x16xbf16, #tpu.memory_space<vmem>>, vector<32x16xbf16>
    %c0_1 = arith.constant 0 : index
    %c0_2 = arith.constant 0 : index
    %1 = vector.load %arg3[%c0_1, %c0_2] : memref<24x32xbf16, #tpu.memory_space<vmem>>, vector<24x32xbf16>
    %c0_3 = arith.constant 0 : index
    %c0_4 = arith.constant 0 : index
    %2 = vector.load %arg4[%c0_3, %c0_4] : memref<16x1xf32, #tpu.memory_space<vmem>>, vector<16x1xf32>
    %c0_5 = arith.constant 0 : index
    %c0_6 = arith.constant 0 : index
    %3 = vector.load %arg5[%c0_5, %c0_6] : memref<16x1xf32, #tpu.memory_space<vmem>>, vector<16x1xf32>
    %c0_7 = arith.constant 0 : index
    %c0_8 = arith.constant 0 : index
    %4 = vector.load %arg6[%c0_7, %c0_8] : memref<32x1xf32, #tpu.memory_space<vmem>>, vector<32x1xf32>
    %5 = tpu.iota {dimensions = array<i32: 1>} : vector<8x128xi32>
    %c0_i32 = arith.constant 0 : i32
    %6 = vector.broadcast %c0_i32 : i32 to vector<8x128xi32>
    %7 = arith.cmpi eq, %5, %6 : vector<8x128xi32>
    %c127_i32 = arith.constant 127 : i32
    %8 = vector.broadcast %c127_i32 : i32 to vector<8x128xi32>
    %9 = arith.cmpi eq, %5, %8 : vector<8x128xi32>
    %c0_9 = arith.constant 0 : index
    %c0_10 = arith.constant 0 : index
    %c0_11 = arith.constant 0 : index
    %10 = vector.load %arg1[%c0_9, %c0_10, %c0_11] : memref<4x16x128xf32, #tpu.memory_space<vmem>>, vector<1x16x128xf32>
    %11 = vector.shape_cast %10 : vector<1x16x128xf32> to vector<16x128xf32>
    %12 = vector.broadcast %2 : vector<16x1xf32> to vector<16x128xf32>
    %13 = arith.mulf %11, %12 : vector<16x128xf32>
    %14 = vector.broadcast %3 : vector<16x1xf32> to vector<16x128xf32>
    %15 = arith.addf %13, %14 : vector<16x128xf32>
    %cst = arith.constant 0.000000e+00 : f32
    %16 = vector.broadcast %cst : f32 to vector<16x128xf32>
    %17 = arith.maximumf %15, %16 : vector<16x128xf32>
    %18 = arith.truncf %17 : vector<16x128xf32> to vector<16x128xbf16>
    %cst_12 = arith.constant dense<0.000000e+00> : vector<32x128xf32>
    %19 = tpu.matmul %0, %18, %cst_12 {dimension_numbers = #tpu.dot_dimension_numbers<[1], [0], [0], [1], [0, 0, 1, 1], [], []>} : vector<32x16xbf16>, vector<16x128xbf16>, vector<32x128xf32> -> vector<32x128xf32>
    %20 = vector.broadcast %4 : vector<32x1xf32> to vector<32x128xf32>
    %21 = arith.addf %19, %20 : vector<32x128xf32>
    %cst_13 = arith.constant 0.000000e+00 : f32
    %22 = vector.broadcast %cst_13 : f32 to vector<32x128xf32>
    %23 = arith.maximumf %21, %22 : vector<32x128xf32>
    %24 = arith.truncf %23 : vector<32x128xf32> to vector<32x128xbf16>
    %cst_14 = arith.constant dense<0.000000e+00> : vector<24x128xf32>
    %25 = tpu.matmul %1, %24, %cst_14 {dimension_numbers = #tpu.dot_dimension_numbers<[1], [0], [0], [1], [0, 0, 1, 1], [], []>} : vector<24x32xbf16>, vector<32x128xbf16>, vector<24x128xf32> -> vector<24x128xf32>
    %26 = vector.extract_strided_slice %25 {offsets = [0, 0], sizes = [8, 128], strides = [1, 1]} : vector<24x128xf32> to vector<8x128xf32>
    %27 = vector.extract_strided_slice %25 {offsets = [8, 0], sizes = [8, 128], strides = [1, 1]} : vector<24x128xf32> to vector<8x128xf32>
    %28 = vector.extract_strided_slice %25 {offsets = [16, 0], sizes = [8, 128], strides = [1, 1]} : vector<24x128xf32> to vector<8x128xf32>
    %c1_i32 = arith.constant 1 : i32
    %29 = tpu.dynamic_rotate %26 by %c1_i32 dim 1 : vector<8x128xf32>, i32 -> vector<8x128xf32>
    %cst_15 = arith.constant 0.000000e+00 : f32
    %30 = vector.broadcast %cst_15 : f32 to vector<8x128xf32>
    %31 = arith.select %7, %30, %29 : vector<8x128xi1>, vector<8x128xf32>
    %c127_i32_16 = arith.constant 127 : i32
    %32 = tpu.dynamic_rotate %28 by %c127_i32_16 dim 1 : vector<8x128xf32>, i32 -> vector<8x128xf32>
    %cst_17 = arith.constant 0.000000e+00 : f32
    %33 = vector.broadcast %cst_17 : f32 to vector<8x128xf32>
    %34 = arith.select %9, %33, %32 : vector<8x128xi1>, vector<8x128xf32>
    %35 = arith.addf %31, %27 : vector<8x128xf32>
    %36 = arith.addf %35, %34 : vector<8x128xf32>
    %c0_18 = arith.constant 0 : index
    %c0_19 = arith.constant 0 : index
    %c0_20 = arith.constant 0 : index
    %37 = vector.load %arg7[%c0_18, %c0_19, %c0_20] : memref<4x8x128xf32, #tpu.memory_space<vmem>>, vector<1x8x128xf32>
    %38 = vector.shape_cast %37 : vector<1x8x128xf32> to vector<8x128xf32>
    %39 = vector.shape_cast %36 : vector<8x128xf32> to vector<1x8x128xf32>
    tpu.vector_store %arg7[%c0_18, %c0_19, %c0_20], %39 {strides = array<i32>} : memref<4x8x128xf32, #tpu.memory_space<vmem>>, vector<1x8x128xf32>,
    %c1 = arith.constant 1 : index
    %c0_21 = arith.constant 0 : index
    %c0_22 = arith.constant 0 : index
    %40 = vector.load %arg1[%c1, %c0_21, %c0_22] : memref<4x16x128xf32, #tpu.memory_space<vmem>>, vector<1x16x128xf32>
    %41 = vector.shape_cast %40 : vector<1x16x128xf32> to vector<16x128xf32>
    %42 = vector.broadcast %2 : vector<16x1xf32> to vector<16x128xf32>
    %43 = arith.mulf %41, %42 : vector<16x128xf32>
    %44 = vector.broadcast %3 : vector<16x1xf32> to vector<16x128xf32>
    %45 = arith.addf %43, %44 : vector<16x128xf32>
    %cst_23 = arith.constant 0.000000e+00 : f32
    %46 = vector.broadcast %cst_23 : f32 to vector<16x128xf32>
    %47 = arith.maximumf %45, %46 : vector<16x128xf32>
    %48 = arith.truncf %47 : vector<16x128xf32> to vector<16x128xbf16>
    %cst_24 = arith.constant dense<0.000000e+00> : vector<32x128xf32>
    %49 = tpu.matmul %0, %48, %cst_24 {dimension_numbers = #tpu.dot_dimension_numbers<[1], [0], [0], [1], [0, 0, 1, 1], [], []>} : vector<32x16xbf16>, vector<16x128xbf16>, vector<32x128xf32> -> vector<32x128xf32>
    %50 = vector.broadcast %4 : vector<32x1xf32> to vector<32x128xf32>
    %51 = arith.addf %49, %50 : vector<32x128xf32>
    %cst_25 = arith.constant 0.000000e+00 : f32
    %52 = vector.broadcast %cst_25 : f32 to vector<32x128xf32>
    %53 = arith.maximumf %51, %52 : vector<32x128xf32>
    %54 = arith.truncf %53 : vector<32x128xf32> to vector<32x128xbf16>
    %cst_26 = arith.constant dense<0.000000e+00> : vector<24x128xf32>
    %55 = tpu.matmul %1, %54, %cst_26 {dimension_numbers = #tpu.dot_dimension_numbers<[1], [0], [0], [1], [0, 0, 1, 1], [], []>} : vector<24x32xbf16>, vector<32x128xbf16>, vector<24x128xf32> -> vector<24x128xf32>
    %56 = vector.extract_strided_slice %55 {offsets = [0, 0], sizes = [8, 128], strides = [1, 1]} : vector<24x128xf32> to vector<8x128xf32>
    %57 = vector.extract_strided_slice %55 {offsets = [8, 0], sizes = [8, 128], strides = [1, 1]} : vector<24x128xf32> to vector<8x128xf32>
    %58 = vector.extract_strided_slice %55 {offsets = [16, 0], sizes = [8, 128], strides = [1, 1]} : vector<24x128xf32> to vector<8x128xf32>
    %c1_i32_27 = arith.constant 1 : i32
    %59 = tpu.dynamic_rotate %56 by %c1_i32_27 dim 1 : vector<8x128xf32>, i32 -> vector<8x128xf32>
    %cst_28 = arith.constant 0.000000e+00 : f32
    %60 = vector.broadcast %cst_28 : f32 to vector<8x128xf32>
    %61 = arith.select %7, %60, %59 : vector<8x128xi1>, vector<8x128xf32>
    %c127_i32_29 = arith.constant 127 : i32
    %62 = tpu.dynamic_rotate %58 by %c127_i32_29 dim 1 : vector<8x128xf32>, i32 -> vector<8x128xf32>
    %cst_30 = arith.constant 0.000000e+00 : f32
    %63 = vector.broadcast %cst_30 : f32 to vector<8x128xf32>
    %64 = arith.select %9, %63, %62 : vector<8x128xi1>, vector<8x128xf32>
    %65 = arith.addf %61, %57 : vector<8x128xf32>
    %66 = arith.addf %65, %64 : vector<8x128xf32>
    %c1_31 = arith.constant 1 : index
    %c0_32 = arith.constant 0 : index
    %c0_33 = arith.constant 0 : index
    %67 = vector.load %arg7[%c1_31, %c0_32, %c0_33] : memref<4x8x128xf32, #tpu.memory_space<vmem>>, vector<1x8x128xf32>
    %68 = vector.shape_cast %67 : vector<1x8x128xf32> to vector<8x128xf32>
    %69 = vector.shape_cast %66 : vector<8x128xf32> to vector<1x8x128xf32>
    tpu.vector_store %arg7[%c1_31, %c0_32, %c0_33], %69 {strides = array<i32>} : memref<4x8x128xf32, #tpu.memory_space<vmem>>, vector<1x8x128xf32>,
    %c2 = arith.constant 2 : index
    %c0_34 = arith.constant 0 : index
    %c0_35 = arith.constant 0 : index
    %70 = vector.load %arg1[%c2, %c0_34, %c0_35] : memref<4x16x128xf32, #tpu.memory_space<vmem>>, vector<1x16x128xf32>
    %71 = vector.shape_cast %70 : vector<1x16x128xf32> to vector<16x128xf32>
    %72 = vector.broadcast %2 : vector<16x1xf32> to vector<16x128xf32>
    %73 = arith.mulf %71, %72 : vector<16x128xf32>
    %74 = vector.broadcast %3 : vector<16x1xf32> to vector<16x128xf32>
    %75 = arith.addf %73, %74 : vector<16x128xf32>
    %cst_36 = arith.constant 0.000000e+00 : f32
    %76 = vector.broadcast %cst_36 : f32 to vector<16x128xf32>
    %77 = arith.maximumf %75, %76 : vector<16x128xf32>
    %78 = arith.truncf %77 : vector<16x128xf32> to vector<16x128xbf16>
    %cst_37 = arith.constant dense<0.000000e+00> : vector<32x128xf32>
    %79 = tpu.matmul %0, %78, %cst_37 {dimension_numbers = #tpu.dot_dimension_numbers<[1], [0], [0], [1], [0, 0, 1, 1], [], []>} : vector<32x16xbf16>, vector<16x128xbf16>, vector<32x128xf32> -> vector<32x128xf32>
    %80 = vector.broadcast %4 : vector<32x1xf32> to vector<32x128xf32>
    %81 = arith.addf %79, %80 : vector<32x128xf32>
    %cst_38 = arith.constant 0.000000e+00 : f32
    %82 = vector.broadcast %cst_38 : f32 to vector<32x128xf32>
    %83 = arith.maximumf %81, %82 : vector<32x128xf32>
    %84 = arith.truncf %83 : vector<32x128xf32> to vector<32x128xbf16>
    %cst_39 = arith.constant dense<0.000000e+00> : vector<24x128xf32>
    %85 = tpu.matmul %1, %84, %cst_39 {dimension_numbers = #tpu.dot_dimension_numbers<[1], [0], [0], [1], [0, 0, 1, 1], [], []>} : vector<24x32xbf16>, vector<32x128xbf16>, vector<24x128xf32> -> vector<24x128xf32>
    %86 = vector.extract_strided_slice %85 {offsets = [0, 0], sizes = [8, 128], strides = [1, 1]} : vector<24x128xf32> to vector<8x128xf32>
    %87 = vector.extract_strided_slice %85 {offsets = [8, 0], sizes = [8, 128], strides = [1, 1]} : vector<24x128xf32> to vector<8x128xf32>
    %88 = vector.extract_strided_slice %85 {offsets = [16, 0], sizes = [8, 128], strides = [1, 1]} : vector<24x128xf32> to vector<8x128xf32>
    %c1_i32_40 = arith.constant 1 : i32
    %89 = tpu.dynamic_rotate %86 by %c1_i32_40 dim 1 : vector<8x128xf32>, i32 -> vector<8x128xf32>
    %cst_41 = arith.constant 0.000000e+00 : f32
    %90 = vector.broadcast %cst_41 : f32 to vector<8x128xf32>
    %91 = arith.select %7, %90, %89 : vector<8x128xi1>, vector<8x128xf32>
    %c127_i32_42 = arith.constant 127 : i32
    %92 = tpu.dynamic_rotate %88 by %c127_i32_42 dim 1 : vector<8x128xf32>, i32 -> vector<8x128xf32>
    %cst_43 = arith.constant 0.000000e+00 : f32
    %93 = vector.broadcast %cst_43 : f32 to vector<8x128xf32>
    %94 = arith.select %9, %93, %92 : vector<8x128xi1>, vector<8x128xf32>
    %95 = arith.addf %91, %87 : vector<8x128xf32>
    %96 = arith.addf %95, %94 : vector<8x128xf32>
    %c2_44 = arith.constant 2 : index
    %c0_45 = arith.constant 0 : index
    %c0_46 = arith.constant 0 : index
    %97 = vector.load %arg7[%c2_44, %c0_45, %c0_46] : memref<4x8x128xf32, #tpu.memory_space<vmem>>, vector<1x8x128xf32>
    %98 = vector.shape_cast %97 : vector<1x8x128xf32> to vector<8x128xf32>
    %99 = vector.shape_cast %96 : vector<8x128xf32> to vector<1x8x128xf32>
    tpu.vector_store %arg7[%c2_44, %c0_45, %c0_46], %99 {strides = array<i32>} : memref<4x8x128xf32, #tpu.memory_space<vmem>>, vector<1x8x128xf32>,
    %c3 = arith.constant 3 : index
    %c0_47 = arith.constant 0 : index
    %c0_48 = arith.constant 0 : index
    %100 = vector.load %arg1[%c3, %c0_47, %c0_48] : memref<4x16x128xf32, #tpu.memory_space<vmem>>, vector<1x16x128xf32>
    %101 = vector.shape_cast %100 : vector<1x16x128xf32> to vector<16x128xf32>
    %102 = vector.broadcast %2 : vector<16x1xf32> to vector<16x128xf32>
    %103 = arith.mulf %101, %102 : vector<16x128xf32>
    %104 = vector.broadcast %3 : vector<16x1xf32> to vector<16x128xf32>
    %105 = arith.addf %103, %104 : vector<16x128xf32>
    %cst_49 = arith.constant 0.000000e+00 : f32
    %106 = vector.broadcast %cst_49 : f32 to vector<16x128xf32>
    %107 = arith.maximumf %105, %106 : vector<16x128xf32>
    %108 = arith.truncf %107 : vector<16x128xf32> to vector<16x128xbf16>
    %cst_50 = arith.constant dense<0.000000e+00> : vector<32x128xf32>
    %109 = tpu.matmul %0, %108, %cst_50 {dimension_numbers = #tpu.dot_dimension_numbers<[1], [0], [0], [1], [0, 0, 1, 1], [], []>} : vector<32x16xbf16>, vector<16x128xbf16>, vector<32x128xf32> -> vector<32x128xf32>
    %110 = vector.broadcast %4 : vector<32x1xf32> to vector<32x128xf32>
    %111 = arith.addf %109, %110 : vector<32x128xf32>
    %cst_51 = arith.constant 0.000000e+00 : f32
    %112 = vector.broadcast %cst_51 : f32 to vector<32x128xf32>
    %113 = arith.maximumf %111, %112 : vector<32x128xf32>
    %114 = arith.truncf %113 : vector<32x128xf32> to vector<32x128xbf16>
    %cst_52 = arith.constant dense<0.000000e+00> : vector<24x128xf32>
    %115 = tpu.matmul %1, %114, %cst_52 {dimension_numbers = #tpu.dot_dimension_numbers<[1], [0], [0], [1], [0, 0, 1, 1], [], []>} : vector<24x32xbf16>, vector<32x128xbf16>, vector<24x128xf32> -> vector<24x128xf32>
    %116 = vector.extract_strided_slice %115 {offsets = [0, 0], sizes = [8, 128], strides = [1, 1]} : vector<24x128xf32> to vector<8x128xf32>
    %117 = vector.extract_strided_slice %115 {offsets = [8, 0], sizes = [8, 128], strides = [1, 1]} : vector<24x128xf32> to vector<8x128xf32>
    %118 = vector.extract_strided_slice %115 {offsets = [16, 0], sizes = [8, 128], strides = [1, 1]} : vector<24x128xf32> to vector<8x128xf32>
    %c1_i32_53 = arith.constant 1 : i32
    %119 = tpu.dynamic_rotate %116 by %c1_i32_53 dim 1 : vector<8x128xf32>, i32 -> vector<8x128xf32>
    %cst_54 = arith.constant 0.000000e+00 : f32
    %120 = vector.broadcast %cst_54 : f32 to vector<8x128xf32>
    %121 = arith.select %7, %120, %119 : vector<8x128xi1>, vector<8x128xf32>
    %c127_i32_55 = arith.constant 127 : i32
    %122 = tpu.dynamic_rotate %118 by %c127_i32_55 dim 1 : vector<8x128xf32>, i32 -> vector<8x128xf32>
    %cst_56 = arith.constant 0.000000e+00 : f32
    %123 = vector.broadcast %cst_56 : f32 to vector<8x128xf32>
    %124 = arith.select %9, %123, %122 : vector<8x128xi1>, vector<8x128xf32>
    %125 = arith.addf %121, %117 : vector<8x128xf32>
    %126 = arith.addf %125, %124 : vector<8x128xf32>
    %c3_57 = arith.constant 3 : index
    %c0_58 = arith.constant 0 : index
    %c0_59 = arith.constant 0 : index
    %127 = vector.load %arg7[%c3_57, %c0_58, %c0_59] : memref<4x8x128xf32, #tpu.memory_space<vmem>>, vector<1x8x128xf32>
    %128 = vector.shape_cast %127 : vector<1x8x128xf32> to vector<8x128xf32>
    %129 = vector.shape_cast %126 : vector<8x128xf32> to vector<1x8x128xf32>
    tpu.vector_store %arg7[%c3_57, %c0_58, %c0_59], %129 {strides = array<i32>} : memref<4x8x128xf32, #tpu.memory_space<vmem>>, vector<1x8x128xf32>,
    return
  }
  func.func @transform_0(%arg0: i32) -> (i32, i32, i32) {
    %c0_i32 = arith.constant 0 : i32
    %c0_i32_0 = arith.constant 0 : i32
    %c0_i32_1 = arith.constant 0 : i32
    return %arg0, %c0_i32, %c0_i32_0 : i32, i32, i32
  }
  func.func @transform_1(%arg0: i32) -> (i32, i32) {
    %c0_i32 = arith.constant 0 : i32
    %c0_i32_0 = arith.constant 0 : i32
    %c0_i32_1 = arith.constant 0 : i32
    return %c0_i32, %c0_i32_0 : i32, i32
  }
  func.func @transform_2(%arg0: i32) -> (i32, i32) {
    %c0_i32 = arith.constant 0 : i32
    %c0_i32_0 = arith.constant 0 : i32
    %c0_i32_1 = arith.constant 0 : i32
    return %c0_i32, %c0_i32_0 : i32, i32
  }
  func.func @transform_3(%arg0: i32) -> (i32, i32) {
    %c0_i32 = arith.constant 0 : i32
    %c0_i32_0 = arith.constant 0 : i32
    %c0_i32_1 = arith.constant 0 : i32
    return %c0_i32, %c0_i32_0 : i32, i32
  }
  func.func @transform_4(%arg0: i32) -> (i32, i32) {
    %c0_i32 = arith.constant 0 : i32
    %c0_i32_0 = arith.constant 0 : i32
    %c0_i32_1 = arith.constant 0 : i32
    return %c0_i32, %c0_i32_0 : i32, i32
  }
  func.func @transform_5(%arg0: i32) -> (i32, i32) {
    %c0_i32 = arith.constant 0 : i32
    %c0_i32_0 = arith.constant 0 : i32
    %c0_i32_1 = arith.constant 0 : i32
    return %c0_i32, %c0_i32_0 : i32, i32
  }
  func.func @transform_6(%arg0: i32) -> (i32, i32, i32) {
    %c0_i32 = arith.constant 0 : i32
    %c0_i32_0 = arith.constant 0 : i32
    %c0_i32_1 = arith.constant 0 : i32
    return %arg0, %c0_i32, %c0_i32_0 : i32, i32, i32
  }
}

</mosaic_0001>

<llo_original>
// kernel: tpu_custom_call.1
$region0: #{tpu_custom_call.1}
  #allocation0 [shape = 'u32[]', space=smem, size = 0x4, offset = 0x4, fixed_abs, tag = 'smem constant byte address 0x4 - core index']
  #allocation1 [shape = 'u32[72,128]{1,0:T(1,128)}', space=vmem, size = 0x9000, scoped, tag = 'internal scratch']
  %s0 = inlined_call_operand.hbm [shape: f32[8,16,128], index: 0, kind: input, shape index: {}]
  %s1 = inlined_call_operand.vmem [shape: bf16[32,16], index: 1, kind: input, shape index: {}]
  %s2 = inlined_call_operand.vmem [shape: bf16[24,32], index: 2, kind: input, shape index: {}]
  %s3 = inlined_call_operand.vmem [shape: f32[16,1], index: 3, kind: input, shape index: {}]
  %s4 = inlined_call_operand.vmem [shape: f32[16,1], index: 4, kind: input, shape index: {}]
  %s5 = inlined_call_operand.vmem [shape: f32[32,1], index: 5, kind: input, shape index: {}]
  %s6 = inlined_call_operand.hbm [shape: f32[8,8,128], index: 6, kind: output, shape index: {}]
  %s7 = sld [smem:[#allocation0]]
  $region61: #{tpu_custom_call.1} parent=0
    _
  %s9 = ssub.s32 1, %s7
  %s10 = scalar_select 0, %s9, %s7
  $region1: #{tpu_custom_call.1} parent=0
    #allocation2 [shape = 'u8[65536]{0}', space=vmem, size = 0x10000, scoped, tag = 'input window, operand 0']
    #allocation3 [shape = 's32[2]{0}', space=sflag, size = 0x8, scoped, tag = 'scoped memory for tpu_custom_call.1']
    #allocation4 [shape = 's32[2]{0}', space=sflag, size = 0x8, scoped, tag = 'scoped memory for tpu_custom_call.1']
    #allocation5 [shape = 'u8[32768]{0}', space=vmem, size = 0x8000, scoped, tag = 'output window, operand 0']
    %11 = vsyncpa [#allocation3], 0
    %s12 = scalar_lea.sflag [#allocation3], 1
    %13 = vsyncpa %s12, 0
    %14 = vsyncpa [#allocation4], 0
    %s15 = scalar_lea.sflag [#allocation4], 1
    %16 = vsyncpa %s15, 0
    loop: start=0, step=1, limit=4
    $region2: #{tpu_custom_call.1} parent=1 // loop_pre_header
      _
    $region3: #{tpu_custom_call.1} parent=1 // loop_header
      %s18 = sphi 0, %s22
      %p19 = scmp.ge.s32.totalorder %s18, 4
      %s28 = sphi 0, %s30
      %s31 = sphi 0, %s28
      %s32 = sphi 0, %s31
      %s48 = sphi 0, %s32
      %s52 = sphi 0, %s52
      %s54 = sphi 0, %s52
      %s55 = sphi 0, %s54
      %s69 = sphi 0, %s55
      %s73 = sphi 0, %s73
      %s75 = sphi 0, %s73
      %s76 = sphi 0, %s75
      %s90 = sphi 0, %s76
      %s94 = sphi 0, %s94
      %s96 = sphi 0, %s94
      %s97 = sphi 0, %s96
      %s111 = sphi 0, %s97
      %s115 = sphi 0, %s115
      %s117 = sphi 0, %s115
      %s118 = sphi 0, %s117
      %s132 = sphi 0, %s118
      %s136 = sphi 0, %s136
      %s138 = sphi 0, %s136
      %s139 = sphi 0, %s138
      %s153 = sphi 0, %s139
      %s159 = sphi 0, %s161
      %s162 = sphi 0, %s159
      %s163 = sphi 0, %s162
      %s179 = sphi 0, %s163
    $region4: #{tpu_custom_call.1} parent=1 // loop_header_branch
      %21 = sbr.rel (%p19) target = $region8
    $region5: #{tpu_custom_call.1} parent=1 // loop_body
      %s23 = ssub.s32 %s18, 1
      %s24 = ssub.s32 %s18, 2
      %s25 = sadd.s32 %s18, 1
      %s26 = ssub.s32 %s18, %s25
      %p27 = scmp.eq.s32.totalorder %s26, 0
      %s29 = sadd.s32 %s28, 1
      %s30 = scalar_select %p27, %s28, %s29
      %p33 = pneg %p27
      %p34 = scmp.eq.s32.totalorder %s18, 1
      %p35 = por %p33, %p34
      %p36 = scmp.ne.s32.totalorder %s28, %s31
      %p37 = scmp.eq.s32.totalorder %s18, 0
      %p38 = por %p36, %p37
      %p39 = scmp.ne.s32.totalorder %s28, %s31
      %p40 = scmp.eq.s32.totalorder %s23, 1
      %p41 = por %p39, %p40
      %p42 = scmp.ne.s32.totalorder %s31, %s32
      %p43 = scmp.eq.s32.totalorder %s23, 0
      %p44 = por %p42, %p43
      %p45 = scmp.ne.s32.totalorder %s31, %s32
      %p46 = scmp.eq.s32.totalorder %s24, 1
      %p47 = por %p45, %p46
      %p49 = scmp.ne.s32.totalorder %s32, %s48
      %p50 = scmp.eq.s32.totalorder %s24, 0
      %p51 = por %p49, %p50
      %s53 = sadd.s32 %s52, 1
      %p56 = scmp.eq.s32.totalorder %s18, 1
      %p57 = scmp.ne.s32.totalorder %s52, %s54
      %p58 = scmp.eq.s32.totalorder %s18, 0
      %p59 = por %p57, %p58
      %p60 = scmp.ne.s32.totalorder %s52, %s54
      %p61 = scmp.eq.s32.totalorder %s23, 1
      %p62 = por %p60, %p61
      %p63 = scmp.ne.s32.totalorder %s54, %s55
      %p64 = scmp.eq.s32.totalorder %s23, 0
      %p65 = por %p63, %p64
      %p66 = scmp.ne.s32.totalorder %s54, %s55
      %p67 = scmp.eq.s32.totalorder %s24, 1
      %p68 = por %p66, %p67
      %p70 = scmp.ne.s32.totalorder %s55, %s69
      %p71 = scmp.eq.s32.totalorder %s24, 0
      %p72 = por %p70, %p71
      %s74 = sadd.s32 %s73, 1
      %p77 = scmp.eq.s32.totalorder %s18, 1
      %p78 = scmp.ne.s32.totalorder %s73, %s75
      %p79 = scmp.eq.s32.totalorder %s18, 0
      %p80 = por %p78, %p79
      %p81 = scmp.ne.s32.totalorder %s73, %s75
      %p82 = scmp.eq.s32.totalorder %s23, 1
      %p83 = por %p81, %p82
      %p84 = scmp.ne.s32.totalorder %s75, %s76
      %p85 = scmp.eq.s32.totalorder %s23, 0
      %p86 = por %p84, %p85
      %p87 = scmp.ne.s32.totalorder %s75, %s76
      %p88 = scmp.eq.s32.totalorder %s24, 1
      %p89 = por %p87, %p88
      %p91 = scmp.ne.s32.totalorder %s76, %s90
      %p92 = scmp.eq.s32.totalorder %s24, 0
      %p93 = por %p91, %p92
      %s95 = sadd.s32 %s94, 1
      %p98 = scmp.eq.s32.totalorder %s18, 1
      %p99 = scmp.ne.s32.totalorder %s94, %s96
      %p100 = scmp.eq.s32.totalorder %s18, 0
      %p101 = por %p99, %p100
      %p102 = scmp.ne.s32.totalorder %s94, %s96
      %p103 = scmp.eq.s32.totalorder %s23, 1
      %p104 = por %p102, %p103
      %p105 = scmp.ne.s32.totalorder %s96, %s97
      %p106 = scmp.eq.s32.totalorder %s23, 0
      %p107 = por %p105, %p106
      %p108 = scmp.ne.s32.totalorder %s96, %s97
      %p109 = scmp.eq.s32.totalorder %s24, 1
      %p110 = por %p108, %p109
      %p112 = scmp.ne.s32.totalorder %s97, %s111
      %p113 = scmp.eq.s32.totalorder %s24, 0
      %p114 = por %p112, %p113
      %s116 = sadd.s32 %s115, 1
      %p119 = scmp.eq.s32.totalorder %s18, 1
      %p120 = scmp.ne.s32.totalorder %s115, %s117
      %p121 = scmp.eq.s32.totalorder %s18, 0
      %p122 = por %p120, %p121
      %p123 = scmp.ne.s32.totalorder %s115, %s117
      %p124 = scmp.eq.s32.totalorder %s23, 1
      %p125 = por %p123, %p124
      %p126 = scmp.ne.s32.totalorder %s117, %s118
      %p127 = scmp.eq.s32.totalorder %s23, 0
      %p128 = por %p126, %p127
      %p129 = scmp.ne.s32.totalorder %s117, %s118
      %p130 = scmp.eq.s32.totalorder %s24, 1
      %p131 = por %p129, %p130
      %p133 = scmp.ne.s32.totalorder %s118, %s132
      %p134 = scmp.eq.s32.totalorder %s24, 0
      %p135 = por %p133, %p134
      %s137 = sadd.s32 %s136, 1
      %p140 = scmp.eq.s32.totalorder %s18, 1
      %p141 = scmp.ne.s32.totalorder %s136, %s138
      %p142 = scmp.eq.s32.totalorder %s18, 0
      %p143 = por %p141, %p142
      %p144 = scmp.ne.s32.totalorder %s136, %s138
      %p145 = scmp.eq.s32.totalorder %s23, 1
      %p146 = por %p144, %p145
      %p147 = scmp.ne.s32.totalorder %s138, %s139
      %p148 = scmp.eq.s32.totalorder %s23, 0
      %p149 = por %p147, %p148
      %p150 = scmp.ne.s32.totalorder %s138, %s139
      %p151 = scmp.eq.s32.totalorder %s24, 1
      %p152 = por %p150, %p151
      %p154 = scmp.ne.s32.totalorder %s139, %s153
      %p155 = scmp.eq.s32.totalorder %s24, 0
      %p156 = por %p154, %p155
      %s157 = ssub.s32 %s18, %s25
      %p158 = scmp.eq.s32.totalorder %s157, 0
      %s160 = sadd.s32 %s159, 1
      %s161 = scalar_select %p158, %s159, %s160
      %p164 = pneg %p158
      %p165 = scmp.eq.s32.totalorder %s18, 1
      %p166 = por %p164, %p165
      %p167 = scmp.ne.s32.totalorder %s159, %s162
      %p168 = scmp.eq.s32.totalorder %s18, 0
      %p169 = por %p167, %p168
      %p170 = scmp.ne.s32.totalorder %s159, %s162
      %p171 = scmp.eq.s32.totalorder %s23, 1
      %p172 = por %p170, %p171
      %p173 = scmp.ne.s32.totalorder %s162, %s163
      %p174 = scmp.eq.s32.totalorder %s23, 0
      %p175 = por %p173, %p174
      %p176 = scmp.ne.s32.totalorder %s162, %s163
      %p177 = scmp.eq.s32.totalorder %s24, 1
      %p178 = por %p176, %p177
      %p180 = scmp.ne.s32.totalorder %s163, %s179
      %p181 = scmp.eq.s32.totalorder %s24, 0
      %p182 = por %p180, %p181
      %p183 = scmp.le.s32.totalorder 1, %s18
      %p184 = scmp.lt.s32.totalorder %s18, 3
      %p185 = pnand %p183, %p184
      %p186 = pneg %p185
      // Predicated region
      $region9: #{tpu_custom_call.1} parent=5 // pred_check
        _
      $region10: #{tpu_custom_call.1} parent=5 // pred_check_branch
        %188 = sbr.rel (%p185) target = $region12
      $region11: #{tpu_custom_call.1} parent=5 // pred_region
        %s189 = ssub.s32 %s18, 1
        // Predicated region
        $region13: #{tpu_custom_call.1} parent=11 // pred_check
          %p190 = pneg %p65
        $region14: #{tpu_custom_call.1} parent=11 // pred_check_branch
          %192 = sbr.rel (%p190) target = $region16
        $region15: #{tpu_custom_call.1} parent=11 // pred_region
          _
        $region16: #{tpu_custom_call.1} parent=11 // pred_fallthru
          _
        // Predicated region
        $region17: #{tpu_custom_call.1} parent=11 // pred_check
          %p193 = pneg %p86
        $region18: #{tpu_custom_call.1} parent=11 // pred_check_branch
          %195 = sbr.rel (%p193) target = $region20
        $region19: #{tpu_custom_call.1} parent=11 // pred_region
          _
        $region20: #{tpu_custom_call.1} parent=11 // pred_fallthru
          _
        // Predicated region
        $region21: #{tpu_custom_call.1} parent=11 // pred_check
          %p196 = pneg %p107
        $region22: #{tpu_custom_call.1} parent=11 // pred_check_branch
          %198 = sbr.rel (%p196) target = $region24
        $region23: #{tpu_custom_call.1} parent=11 // pred_region
          _
        $region24: #{tpu_custom_call.1} parent=11 // pred_fallthru
          _
        // Predicated region
        $region25: #{tpu_custom_call.1} parent=11 // pred_check
          %p199 = pneg %p128
        $region26: #{tpu_custom_call.1} parent=11 // pred_check_branch
          %201 = sbr.rel (%p199) target = $region28
        $region27: #{tpu_custom_call.1} parent=11 // pred_region
          _
        $region28: #{tpu_custom_call.1} parent=11 // pred_fallthru
          _
        // Predicated region
        $region29: #{tpu_custom_call.1} parent=11 // pred_check
          %p202 = pneg %p149
        $region30: #{tpu_custom_call.1} parent=11 // pred_check_branch
          %204 = sbr.rel (%p202) target = $region32
        $region31: #{tpu_custom_call.1} parent=11 // pred_region
          _
        $region32: #{tpu_custom_call.1} parent=11 // pred_fallthru
          _
      $region12: #{tpu_custom_call.1} parent=5 // pred_fallthru
        _
      %p205 = scmp.lt.s32.totalorder %s18, 2
      // Predicated region
      $region33: #{tpu_custom_call.1} parent=5 // pred_check
        %p206 = pneg %p205
      $region34: #{tpu_custom_call.1} parent=5 // pred_check_branch
        %208 = sbr.rel (%p206) target = $region36
      $region35: #{tpu_custom_call.1} parent=5 // pred_region
        // Predicated region
        $region37: #{tpu_custom_call.1} parent=35 // pred_check
          %p209 = pneg %p38
        $region38: #{tpu_custom_call.1} parent=35 // pred_check_branch
          %211 = sbr.rel (%p209) target = $region40
        $region39: #{tpu_custom_call.1} parent=35 // pred_region
          %s212 = sand.u32 %s28, 1
          %s213 = scalar_lea.sflag [#allocation3], %s212
          %s214 = sand.u32 %s28, 1
          %s215 = smul.addr %s214, 64
          %s216 = scalar_lea.vmem [#allocation2], %s215
          %s217 = smul.u32 4, %s18
          %219 = vsyncadd %s213, 0
          %s220 = smul.addr %s217, 2
          %s221 = smul.addr %s220, 8
          %s222 = scalar_lea.hbm %s0, %s221
          %s223 = sshll.u32 %s222, 4
          %s224 = int_to_ptr.hbm [resolvable:$true] %s223
          %s225 = sshll.u32 %s216, 4
          %s226 = int_to_ptr.vmem [resolvable:$true] %s225
          %231 = dma.hbm_to_vmem [thread:$0]  %s224, 1024, %s226, %s213, 128, 128, 8
        $region40: #{tpu_custom_call.1} parent=35 // pred_fallthru
          _
      $region36: #{tpu_custom_call.1} parent=5 // pred_fallthru
        _
      %p232 = scmp.le.s32.totalorder 1, %s18
      %p233 = scmp.lt.s32.totalorder %s18, 3
      %p234 = pnand %p232, %p233
      %p235 = pneg %p234
      // Predicated region
      $region41: #{tpu_custom_call.1} parent=5 // pred_check
        _
      $region42: #{tpu_custom_call.1} parent=5 // pred_check_branch
        %237 = sbr.rel (%p234) target = $region44
      $region43: #{tpu_custom_call.1} parent=5 // pred_region
        %s238 = ssub.s32 %s18, 1
        %s239 = sand.u32 %s31, 1
        %s240 = scalar_lea.sflag [#allocation3], %s239
        %s241 = sand.u32 %s31, 1
        %s242 = smul.addr %s241, 64
        %s243 = scalar_lea.vmem [#allocation2], %s242
        // Predicated region
        $region45: #{tpu_custom_call.1} parent=43 // pred_check
          %p244 = pneg %p44
        $region46: #{tpu_custom_call.1} parent=43 // pred_check_branch
          %246 = sbr.rel (%p244) target = $region48
        $region47: #{tpu_custom_call.1} parent=43 // pred_region
          %248 = dma.done %s240, 1024
        $region48: #{tpu_custom_call.1} parent=43 // pred_fallthru
          _
        %s249 = sand.u32 %s31, 1
        %s250 = scalar_lea.sflag [#allocation3], %s249
        %s251 = sand.u32 %s31, 1
        %s252 = smul.addr %s251, 64
        %s253 = scalar_lea.vmem [#allocation2], %s252
        %p254 = pneg %p44
        %p255 = pneg %p41
        %p256 = pneg %p65
        %p257 = pneg %p62
        %p258 = pneg %p86
        %p259 = pneg %p83
        %p260 = pneg %p107
        %p261 = pneg %p104
        %p262 = pneg %p128
        %p263 = pneg %p125
        %p264 = pneg %p149
        %p265 = pneg %p146
        %p266 = pneg %p175
        %p267 = pneg %p172
        %s268 = sand.u32 %s162, 1
        %s269 = scalar_lea.sflag [#allocation4], %s268
        %s270 = sand.u32 %s162, 1
        %s271 = smul.addr %s270, 32
        %s272 = scalar_lea.vmem [#allocation5], %s271
        %s273 = smul.u32 4, %s23
        %s274 = smul.u32 4, %s23
        %v276 = vld [vmem:[%s1] sm:$0xf]
        %v277 = vld [vmem:[%s1 + $0x4] sm:$0xf]
        %v278 = vld [vmem:[%s1 + $0x8] sm:$0xf]
        %v279 = vld [vmem:[%s1 + $0xc] sm:$0xf]
        %v280 = vld [vmem:[%s2] sm:$0xf]
        %v281 = vld [vmem:[%s2 + $0x4] sm:$0xf]
        %v282 = vld [vmem:[%s2 + $0x8] sm:$0xf]
        %v283 = vld [vmem:[%s3] sm:$0xff]
        %v284 = vld [vmem:[%s3 + $0x8] sm:$0xff]
        %v285 = vld [vmem:[%s4] sm:$0xff]
        %v286 = vld [vmem:[%s4 + $0x8] sm:$0xff]
        %v287 = vld [vmem:[%s5] sm:$0xff]
        %v288 = vld [vmem:[%s5 + $0x8] sm:$0xff]
        %v289 = vld [vmem:[%s5 + $0x10] sm:$0xff]
        %v290 = vld [vmem:[%s5 + $0x18] sm:$0xff]
        %v291 = vlaneseq
        %v292 = vand.u32 %v291, 127
        %vm293 = vcmp.eq.s32.totalorder %v292, 0
        %vm294 = vcmp.eq.s32.totalorder %v292, 127
        %v295 = vld [vmem:[%s243] sm:$0xff]
        %v296 = vld [vmem:[%s243 + $0x8] sm:$0xff]
        %298 = vset.pattern.permute.xlu0 0
        %299 = vperm.xlu0 %298, %v283
        %v300 = vpop.permute.xlu0 %299
        %303 = vset.pattern.permute.xlu0 0
        %304 = vperm.xlu0 %303, %v284
        %v305 = vpop.permute.xlu0 %304
        %v307 = vmul.f32 %v295, %v300
        %v308 = vmul.f32 %v296, %v305
        %310 = vset.pattern.permute.xlu0 0
        %311 = vperm.xlu0 %310, %v285
        %v312 = vpop.permute.xlu0 %311
        %315 = vset.pattern.permute.xlu0 0
        %316 = vperm.xlu0 %315, %v286
        %v317 = vpop.permute.xlu0 %316
        %v319 = vadd.f32 %v307, %v312
        %v320 = vadd.f32 %v308, %v317
        %v321 = vmax.f32 %v319, 0.0
        %v322 = vmax.f32 %v320, 0.0
        %v323 = vpack.c.bf16 %v322, %v321
        %325 = vset.pattern.permute.xlu0 0
        %326 = vperm.xlu0 %325, %v287
        %v327 = vpop.permute.xlu0 %326
        %330 = vset.pattern.permute.xlu0 0
        %331 = vperm.xlu0 %330, %v288
        %v332 = vpop.permute.xlu0 %331
        %335 = vset.pattern.permute.xlu0 0
        %336 = vperm.xlu0 %335, %v289
        %v337 = vpop.permute.xlu0 %336
        %340 = vset.pattern.permute.xlu0 0
        %341 = vperm.xlu0 %340, %v290
        %v342 = vpop.permute.xlu0 %341
        %v348 = vunpack.c.l.b16 %v276
        %v349 = vunpack.c.l.b16 %v277
        %v350 = vunpack.c.l.b16 %v278
        %v351 = vunpack.c.l.b16 %v279
        %v352 = vpack.c.b16 %v349, %v348
        %v353 = vpack.c.b16 %v351, %v350
        %vm354 = vcmask 130048
        %v356 = vsel %vm354, %v352, 0
        %v359 = vsel %vm354, %v353, 0
        %361 = vmatpush.bf16.msra.mxu0 0
        %362 = vmatpush.bf16.msra.mxu0 0
        %363 = vmatpush.bf16.msra.mxu0 0
        %364 = vmatpush.bf16.msra.mxu0 0
        %365 = vmatpush.bf16.msra.mxu0 0
        %366 = vmatpush.bf16.msra.mxu0 0
        %367 = vmatpush.bf16.msra.mxu0 0
        %368 = vmatpush.bf16.msra.mxu0 %v323
        %369 = vmatmul.bf16.gmra.mxu0 %v356
        %v370 = vpop.f32.mrf.mxu0
        %v371 = vadd.f32 %v327, %v370
        %v372 = vpop.f32.mrf.mxu0
        %v373 = vadd.f32 %v332, %v372
        %374 = vmatmul.bf16.gmra.mxu0 %v359
        %v375 = vpop.f32.mrf.mxu0
        %v376 = vadd.f32 %v337, %v375
        %v377 = vpop.f32.mrf.mxu0
        %v378 = vadd.f32 %v342, %v377
        %379 = vdwg.mxu0
        %v380 = vmax.f32 %v371, 0.0
        %v381 = vmax.f32 %v373, 0.0
        %v382 = vmax.f32 %v376, 0.0
        %v383 = vmax.f32 %v378, 0.0
        %v384 = vpack.c.bf16 %v381, %v380
        %v385 = vpack.c.bf16 %v383, %v382
        %v389 = vunpack.c.l.b16 %v280
        %v390 = vunpack.c.l.b16 %v281
        %v391 = vunpack.c.l.b16 %v282
        %v392 = vpack.c.b16 %v390, %v389
        %v393 = vpack.c.b16 %v391, %v391
        %vm394 = vcmask 261120
        %v396 = vsel %vm394, %v392, 0
        %v399 = vsel %vm394, %v393, 0
        %401 = vmatpush.bf16.msra.mxu0 0
        %402 = vmatpush.bf16.msra.mxu0 0
        %403 = vmatpush.bf16.msra.mxu0 0
        %404 = vmatpush.bf16.msra.mxu0 0
        %405 = vmatpush.bf16.msra.mxu0 0
        %406 = vmatpush.bf16.msra.mxu0 0
        %407 = vmatpush.bf16.msra.mxu0 %v385
        %408 = vmatpush.bf16.msra.mxu0 %v384
        %409 = vmatmul.bf16.gmra.mxu0 %v396
        %v410 = vpop.f32.mrf.mxu0
        %v411 = vadd.f32 0.0, %v410
        %v412 = vpop.f32.mrf.mxu0
        %v413 = vadd.f32 0.0, %v412
        %414 = vmatmul.bf16.gmra.mxu0 %v399
        %v415 = vpop.f32.mrf.mxu0
        %v416 = vadd.f32 0.0, %v415
        %v417 = vpop.f32.mrf.mxu0
        %418 = vdwg.mxu0
        %419 = vrot.lane.b32.xlu0 %v411, 1
        %v420 = vpop.permute.xlu0 %419
        %v421 = vsel %vm293, 0.0, %v420
        %422 = vrot.lane.b32.xlu0 %v416, 127
        %v423 = vpop.permute.xlu0 %422
        %v424 = vsel %vm294, 0.0, %v423
        %v425 = vadd.f32 %v421, %v413
        %v426 = vadd.f32 %v425, %v424
        %427 = vst [vmem:[%s272] sm:$0xff] %v426
        %s428 = scalar_lea.vmem %s243, 16 [#allocation2]
        %v429 = vld [vmem:[%s428] sm:$0xff]
        %v430 = vld [vmem:[%s428 + $0x8] sm:$0xff]
        %v431 = vmul.f32 %v429, %v300
        %v432 = vmul.f32 %v430, %v305
        %v433 = vadd.f32 %v431, %v312
        %v434 = vadd.f32 %v432, %v317
        %v435 = vmax.f32 %v433, 0.0
        %v436 = vmax.f32 %v434, 0.0
        %v437 = vpack.c.bf16 %v436, %v435
        %438 = vmatpush.bf16.msra.mxu0 0
        %439 = vmatpush.bf16.msra.mxu0 0
        %440 = vmatpush.bf16.msra.mxu0 0
        %441 = vmatpush.bf16.msra.mxu0 0
        %442 = vmatpush.bf16.msra.mxu0 0
        %443 = vmatpush.bf16.msra.mxu0 0
        %444 = vmatpush.bf16.msra.mxu0 0
        %445 = vmatpush.bf16.msra.mxu0 %v437
        %446 = vmatmul.bf16.gmra.mxu0 %v356
        %v447 = vpop.f32.mrf.mxu0
        %v448 = vadd.f32 %v327, %v447
        %v449 = vpop.f32.mrf.mxu0
        %v450 = vadd.f32 %v332, %v449
        %451 = vmatmul.bf16.gmra.mxu0 %v359
        %v452 = vpop.f32.mrf.mxu0
        %v453 = vadd.f32 %v337, %v452
        %v454 = vpop.f32.mrf.mxu0
        %v455 = vadd.f32 %v342, %v454
        %456 = vdwg.mxu0
        %v457 = vmax.f32 %v448, 0.0
        %v458 = vmax.f32 %v450, 0.0
        %v459 = vmax.f32 %v453, 0.0
        %v460 = vmax.f32 %v455, 0.0
        %v461 = vpack.c.bf16 %v458, %v457
        %v462 = vpack.c.bf16 %v460, %v459
        %463 = vmatpush.bf16.msra.mxu0 0
        %464 = vmatpush.bf16.msra.mxu0 0
        %465 = vmatpush.bf16.msra.mxu0 0
        %466 = vmatpush.bf16.msra.mxu0 0
        %467 = vmatpush.bf16.msra.mxu0 0
        %468 = vmatpush.bf16.msra.mxu0 0
        %469 = vmatpush.bf16.msra.mxu0 %v462
        %470 = vmatpush.bf16.msra.mxu0 %v461
        %471 = vmatmul.bf16.gmra.mxu0 %v396
        %v472 = vpop.f32.mrf.mxu0
        %v473 = vadd.f32 0.0, %v472
        %v474 = vpop.f32.mrf.mxu0
        %v475 = vadd.f32 0.0, %v474
        %476 = vmatmul.bf16.gmra.mxu0 %v399
        %v477 = vpop.f32.mrf.mxu0
        %v478 = vadd.f32 0.0, %v477
        %v479 = vpop.f32.mrf.mxu0
        %480 = vdwg.mxu0
        %481 = vrot.lane.b32.xlu0 %v473, 1
        %v482 = vpop.permute.xlu0 %481
        %v483 = vsel %vm293, 0.0, %v482
        %484 = vrot.lane.b32.xlu0 %v478, 127
        %v485 = vpop.permute.xlu0 %484
        %v486 = vsel %vm294, 0.0, %v485
        %v487 = vadd.f32 %v483, %v475
        %v488 = vadd.f32 %v487, %v486
        %s489 = scalar_lea.vmem %s272, 8 [#allocation5]
        %490 = vst [vmem:[%s489] sm:$0xff] %v488
        %s491 = scalar_lea.vmem %s243, 32 [#allocation2]
        %v492 = vld [vmem:[%s491] sm:$0xff]
        %v493 = vld [vmem:[%s491 + $0x8] sm:$0xff]
        %v494 = vmul.f32 %v492, %v300
        %v495 = vmul.f32 %v493, %v305
        %v496 = vadd.f32 %v494, %v312
        %v497 = vadd.f32 %v495, %v317
        %v498 = vmax.f32 %v496, 0.0
        %v499 = vmax.f32 %v497, 0.0
        %v500 = vpack.c.bf16 %v499, %v498
        %501 = vmatpush.bf16.msra.mxu0 0
        %502 = vmatpush.bf16.msra.mxu0 0
        %503 = vmatpush.bf16.msra.mxu0 0
        %504 = vmatpush.bf16.msra.mxu0 0
        %505 = vmatpush.bf16.msra.mxu0 0
        %506 = vmatpush.bf16.msra.mxu0 0
        %507 = vmatpush.bf16.msra.mxu0 0
        %508 = vmatpush.bf16.msra.mxu0 %v500
        %509 = vmatmul.bf16.gmra.mxu0 %v356
        %v510 = vpop.f32.mrf.mxu0
        %v511 = vadd.f32 %v327, %v510
        %v512 = vpop.f32.mrf.mxu0
        %v513 = vadd.f32 %v332, %v512
        %514 = vmatmul.bf16.gmra.mxu0 %v359
        %v515 = vpop.f32.mrf.mxu0
        %v516 = vadd.f32 %v337, %v515
        %v517 = vpop.f32.mrf.mxu0
        %v518 = vadd.f32 %v342, %v517
        %519 = vdwg.mxu0
        %v520 = vmax.f32 %v511, 0.0
        %v521 = vmax.f32 %v513, 0.0
        %v522 = vmax.f32 %v516, 0.0
        %v523 = vmax.f32 %v518, 0.0
        %v524 = vpack.c.bf16 %v521, %v520
        %v525 = vpack.c.bf16 %v523, %v522
        %526 = vmatpush.bf16.msra.mxu0 0
        %527 = vmatpush.bf16.msra.mxu0 0
        %528 = vmatpush.bf16.msra.mxu0 0
        %529 = vmatpush.bf16.msra.mxu0 0
        %530 = vmatpush.bf16.msra.mxu0 0
        %531 = vmatpush.bf16.msra.mxu0 0
        %532 = vmatpush.bf16.msra.mxu0 %v525
        %533 = vmatpush.bf16.msra.mxu0 %v524
        %534 = vmatmul.bf16.gmra.mxu0 %v396
        %v535 = vpop.f32.mrf.mxu0
        %v536 = vadd.f32 0.0, %v535
        %v537 = vpop.f32.mrf.mxu0
        %v538 = vadd.f32 0.0, %v537
        %539 = vmatmul.bf16.gmra.mxu0 %v399
        %v540 = vpop.f32.mrf.mxu0
        %v541 = vadd.f32 0.0, %v540
        %v542 = vpop.f32.mrf.mxu0
        %543 = vdwg.mxu0
        %544 = vrot.lane.b32.xlu0 %v536, 1
        %v545 = vpop.permute.xlu0 %544
        %v546 = vsel %vm293, 0.0, %v545
        %547 = vrot.lane.b32.xlu0 %v541, 127
        %v548 = vpop.permute.xlu0 %547
        %v549 = vsel %vm294, 0.0, %v548
        %v550 = vadd.f32 %v546, %v538
        %v551 = vadd.f32 %v550, %v549
        %s552 = scalar_lea.vmem %s272, 16 [#allocation5]
        %553 = vst [vmem:[%s552] sm:$0xff] %v551
        %s554 = scalar_lea.vmem %s243, 48 [#allocation2]
        %v555 = vld [vmem:[%s554] sm:$0xff]
        %v556 = vld [vmem:[%s554 + $0x8] sm:$0xff]
        %v557 = vmul.f32 %v555, %v300
        %v558 = vmul.f32 %v556, %v305
        %v559 = vadd.f32 %v557, %v312
        %v560 = vadd.f32 %v558, %v317
        %v561 = vmax.f32 %v559, 0.0
        %v562 = vmax.f32 %v560, 0.0
        %v563 = vpack.c.bf16 %v562, %v561
        %564 = vmatpush.bf16.msra.mxu0 0
        %565 = vmatpush.bf16.msra.mxu0 0
        %566 = vmatpush.bf16.msra.mxu0 0
        %567 = vmatpush.bf16.msra.mxu0 0
        %568 = vmatpush.bf16.msra.mxu0 0
        %569 = vmatpush.bf16.msra.mxu0 0
        %570 = vmatpush.bf16.msra.mxu0 0
        %571 = vmatpush.bf16.msra.mxu0 %v563
        %572 = vmatmul.bf16.gmra.mxu0 %v356
        %v573 = vpop.f32.mrf.mxu0
        %v574 = vadd.f32 %v327, %v573
        %v575 = vpop.f32.mrf.mxu0
        %v576 = vadd.f32 %v332, %v575
        %577 = vmatmul.bf16.gmra.mxu0 %v359
        %v578 = vpop.f32.mrf.mxu0
        %v579 = vadd.f32 %v337, %v578
        %v580 = vpop.f32.mrf.mxu0
        %v581 = vadd.f32 %v342, %v580
        %582 = vdwg.mxu0
        %v583 = vmax.f32 %v574, 0.0
        %v584 = vmax.f32 %v576, 0.0
        %v585 = vmax.f32 %v579, 0.0
        %v586 = vmax.f32 %v581, 0.0
        %v587 = vpack.c.bf16 %v584, %v583
        %v588 = vpack.c.bf16 %v586, %v585
        %589 = vmatpush.bf16.msra.mxu0 0
        %590 = vmatpush.bf16.msra.mxu0 0
        %591 = vmatpush.bf16.msra.mxu0 0
        %592 = vmatpush.bf16.msra.mxu0 0
        %593 = vmatpush.bf16.msra.mxu0 0
        %594 = vmatpush.bf16.msra.mxu0 0
        %595 = vmatpush.bf16.msra.mxu0 %v588
        %596 = vmatpush.bf16.msra.mxu0 %v587
        %597 = vmatmul.bf16.gmra.mxu0 %v396
        %v598 = vpop.f32.mrf.mxu0
        %v599 = vadd.f32 0.0, %v598
        %v600 = vpop.f32.mrf.mxu0
        %v601 = vadd.f32 0.0, %v600
        %602 = vmatmul.bf16.gmra.mxu0 %v399
        %v603 = vpop.f32.mrf.mxu0
        %v604 = vadd.f32 0.0, %v603
        %v605 = vpop.f32.mrf.mxu0
        %606 = vdwg.mxu0
        %607 = vrot.lane.b32.xlu0 %v599, 1
        %v608 = vpop.permute.xlu0 %607
        %v609 = vsel %vm293, 0.0, %v608
        %610 = vrot.lane.b32.xlu0 %v604, 127
        %v611 = vpop.permute.xlu0 %610
        %v612 = vsel %vm294, 0.0, %v611
        %v613 = vadd.f32 %v609, %v601
        %v614 = vadd.f32 %v613, %v612
        %s615 = scalar_lea.vmem %s272, 24 [#allocation5]
        %616 = vst [vmem:[%s615] sm:$0xff] %v614
        %s617 = sand.u32 %s162, 1
        %s618 = scalar_lea.sflag [#allocation4], %s617
        %s619 = sand.u32 %s162, 1
        %s620 = smul.addr %s619, 32
        %s621 = scalar_lea.vmem [#allocation5], %s620
        // Predicated region
        $region49: #{tpu_custom_call.1} parent=43 // pred_check
          %p622 = pneg %p172
        $region50: #{tpu_custom_call.1} parent=43 // pred_check_branch
          %624 = sbr.rel (%p622) target = $region52
        $region51: #{tpu_custom_call.1} parent=43 // pred_region
          %s625 = smul.u32 4, %s23
          %627 = vsyncadd %s618, 0
          %s628 = smul.addr %s625, 8
          %s629 = scalar_lea.hbm %s6, %s628
          %s630 = sshll.u32 %s621, 4
          %s631 = int_to_ptr.vmem [resolvable:$true] %s630
          %s632 = sshll.u32 %s629, 4
          %s633 = int_to_ptr.hbm [resolvable:$true] %s632
          %638 = dma.vmem_to_hbm [thread:$0]  %s631, 512, %s633, %s618, 128, 128, 8
        $region52: #{tpu_custom_call.1} parent=43 // pred_fallthru
          _
      $region44: #{tpu_custom_call.1} parent=5 // pred_fallthru
        _
      %p639 = scmp.le.s32.totalorder 2, %s18
      // Predicated region
      $region53: #{tpu_custom_call.1} parent=5 // pred_check
        %p640 = pneg %p639
      $region54: #{tpu_custom_call.1} parent=5 // pred_check_branch
        %642 = sbr.rel (%p640) target = $region56
      $region55: #{tpu_custom_call.1} parent=5 // pred_region
        %s643 = ssub.s32 %s18, 2
        // Predicated region
        $region57: #{tpu_custom_call.1} parent=55 // pred_check
          %p644 = pneg %p178
        $region58: #{tpu_custom_call.1} parent=55 // pred_check_branch
          %646 = sbr.rel (%p644) target = $region60
        $region59: #{tpu_custom_call.1} parent=55 // pred_region
          %s647 = sand.u32 %s163, 1
          %s648 = scalar_lea.sflag [#allocation4], %s647
          %s649 = sand.u32 %s163, 1
          %s650 = smul.addr %s649, 32
          %s651 = scalar_lea.vmem [#allocation5], %s650
          %653 = dma.done %s648, 512
        $region60: #{tpu_custom_call.1} parent=55 // pred_fallthru
          _
      $region56: #{tpu_custom_call.1} parent=5 // pred_fallthru
        _
    $region6: #{tpu_custom_call.1} parent=1 // loop_footer
      %s22 = sadd.s32 1, %s18
    $region7: #{tpu_custom_call.1} parent=1 // loop_footer_branch
      %17 = sbr.rel target = $region3
    $region8: #{tpu_custom_call.1} parent=1 // loop_exit
      _
    %654 = vsyncpa [#allocation3], 1
    %s655 = scalar_lea.sflag [#allocation3], 1
    %656 = vsyncpa %s655, 1
    %657 = vsyncpa [#allocation4], 1
    %s658 = scalar_lea.sflag [#allocation4], 1
    %659 = vsyncpa %s658, 1

</llo_original>
